<compile_context>
chip_gen: v5e
topology: v5e:2x2
jax: 0.10.0
libtpu: 0.0.40
codegen_flags: <defaults>
</compile_context>

<pallas_src>
import functools

import jax
import jax.numpy as jnp
from jax.experimental import pallas as pl
from jax.experimental.pallas import tpu as pltpu

_LANE = 128
_SUBLANE = 8


def _round_up(x, m):
    return ((x + m - 1) // m) * m


def _gather_vmem_kernel(idx_ref, table_ref, out_ref, *, chunk):
    """Small-table fast path: table resident in VMEM, gather via vector ld/st."""
    base = pl.program_id(0) * chunk

    def body(r, carry):
        row = idx_ref[base + r]
        out_ref[pl.ds(r, 1), :] = table_ref[pl.ds(row, 1), :]
        return carry

    jax.lax.fori_loop(0, chunk, body, 0, unroll=8)


def _gather_hbm_kernel(idx_ref, table_hbm, out_ref, sems, *, chunk, num_sems):
    """Large-table path: hand-gather rows from HBM straight into the pipelined
    output block, keeping `num_sems` row DMAs in flight."""
    base = pl.program_id(0) * chunk

    def row_dma(dst_row, src_row, slot):
        # One helper builds both the start and wait descriptors so their
        # shapes can never diverge.
        return pltpu.make_async_copy(
            table_hbm.at[pl.ds(src_row, 1)],
            out_ref.at[pl.ds(dst_row, 1)],
            sems.at[slot])

    def start(r, slot):
        row_dma(r, idx_ref[base + r], slot).start()

    def wait(r, slot):
        # Source slice is a dummy: only dst shape + semaphore matter for wait.
        row_dma(r, 0, slot).wait()

    # Prologue: put num_sems row DMAs in flight.
    for r in range(num_sems):
        start(r, r)

    def body(r, carry):
        slot = r & (num_sems - 1)          # num_sems is a power of two
        nxt = r + num_sems
        # Hoist the SMEM index read + replacement DMA start ABOVE the wait:
        # .wait() breaks SMEM sst->sld forwarding and would put the scalar
        # load on the per-row critical path.
        @pl.when(nxt < chunk)
        def _():
            start(nxt, slot)

        wait(r, slot)
        return carry

    jax.lax.fori_loop(0, chunk, body, 0, unroll=8)


def embedding_lookup(table: jax.Array, word_idxs: jax.Array, *,
                     embed_size: int | None = None, chunk: int | None = None,
                     num_sems: int = 32,
                     vmem_table_bytes: int = 4 << 20) -> jax.Array:
    """Gather rows `table[word_idxs]` with a chunked Pallas TPU kernel.

    `table`'s last dim should already be a 128-lane multiple (EmbeddingModel
    pads once at init); `embed_size` is the true (unpadded) width returned.
    """
    vocab_size, table_cols = table.shape
    if embed_size is None:
        embed_size = table_cols
    orig_shape = word_idxs.shape
    flat = word_idxs.reshape(-1).astype(jnp.int32)
    n = flat.shape[0]

    if n == 0:  # empty lookup -> avoid a zero-size grid
        return jnp.zeros(orig_shape + (embed_size,), table.dtype)

    # PyTorch would raise on OOB indices; here they are clamped because a raw
    # OOB row DMA has no runtime bounds check on TPU.
    flat = jnp.clip(flat, 0, vocab_size - 1)

    # Lane-dense row DMAs / stores need a 128-multiple last dim; the model
    # stores pre-padded tables so this is normally a no-op.
    embed_pad = _round_up(table_cols, _LANE)
    if embed_pad != table_cols:
        # TODO(synk): slow fallback (copies the table every call) - prefer
        # padding the table once at init as EmbeddingModel does.
        table = jnp.pad(table, ((0, 0), (0, embed_pad - table_cols)))

    dtype_bytes = jnp.dtype(table.dtype).itemsize

    # Chunk: big when embed is small (amortize ~0.35us grid-step overhead and
    # the DMA-window prologue/drain), bounded so each output buffer stays
    # <= ~4 MiB (double-buffered output fits v7x's 64 MiB VMEM / 32 MiB scoped
    # default with plenty of headroom).
    n_ceil = _round_up(n, _SUBLANE)
    if chunk is None:
        chunk = 1024 if embed_pad <= 512 else 256
    chunk = max(_SUBLANE, _round_up(chunk, _SUBLANE))
    max_block_bytes = 4 << 20
    while chunk > _SUBLANE and chunk * embed_pad * dtype_bytes > max_block_bytes:
        chunk = max(_SUBLANE, _round_up(chunk // 2, _SUBLANE))
    chunk = min(chunk, n_ceil)

    # Pad the index vector to a whole number of chunks (padded tail gathers
    # row 0; those rows are sliced off below).
    n_pad = _round_up(n, chunk)
    if n_pad != n:
        flat = jnp.pad(flat, (0, n_pad - n))
    num_chunks = n_pad // chunk

    use_vmem_table = vocab_size * embed_pad * dtype_bytes <= vmem_table_bytes

    out_spec = pl.BlockSpec((chunk, embed_pad), lambda i, idx_ref: (i, 0))

    if use_vmem_table:
        kernel = functools.partial(_gather_vmem_kernel, chunk=chunk)
        # Full-array block + constant index_map -> table stays VMEM resident
        # across the whole grid; no per-row DMA descriptors at all.
        table_spec = pl.BlockSpec((vocab_size, embed_pad),
                                  lambda i, idx_ref: (0, 0))
        scratch_shapes = []
    else:
        num_sems = min(num_sems, chunk)
        num_sems = 1 << (num_sems.bit_length() - 1)   # round down to pow2
        kernel = functools.partial(_gather_hbm_kernel, chunk=chunk,
                                   num_sems=num_sems)
        table_spec = pl.BlockSpec(memory_space=pl.ANY)  # table stays in HBM
        scratch_shapes = [pltpu.SemaphoreType.DMA((num_sems,))]

    out = pl.pallas_call(
        kernel,
        out_shape=jax.ShapeDtypeStruct((n_pad, embed_pad), table.dtype),
        grid_spec=pltpu.PrefetchScalarGridSpec(
            # Indices land in SMEM before the grid runs and drive the gathers.
            # TODO(synk): for very large n, tile the indices into SMEM per
            # chunk instead of scalar-prefetching the whole vector.
            num_scalar_prefetch=1,
            grid=(num_chunks,),
            in_specs=[table_spec],
            out_specs=out_spec,
            scratch_shapes=scratch_shapes,
        ),
        compiler_params=pltpu.CompilerParams(
            # Chunks are fully independent -> v7x's two TensorCores split them.
            dimension_semantics=("parallel",),
        ),
        cost_estimate=pl.CostEstimate(
            flops=0,
            transcendentals=0,
            bytes_accessed=2 * n_pad * embed_pad * dtype_bytes + n_pad * 4,
        ),
    )(flat, table)

    out = out[:n, :embed_size]
    return out.reshape(orig_shape + (embed_size,))


class EmbeddingModel:
    """JAX/Pallas port of the PyTorch Skip-Gram EmbeddingModel (forward only)."""

    def __init__(self, vocab_size: int, embed_size: int, key: jax.Array):
        self.vocab_size = vocab_size
        self.embed_size = embed_size
        k_center, k_context = jax.random.split(key)
        # xavier_uniform_: U(-a, a), a = sqrt(6 / (fan_in + fan_out))
        bound = (6.0 / (vocab_size + embed_size)) ** 0.5
        self.center_embeddings = jax.random.uniform(
            k_center, (vocab_size, embed_size), jnp.float32, -bound, bound)
        self.context_embeddings = jax.random.uniform(
            k_context, (vocab_size, embed_size), jnp.float32, -bound, bound)
        # One-time lane padding (128 multiple) so the lookup path never has to
        # re-pad (and copy) the whole table in HBM on every call.
        embed_pad = _round_up(embed_size, _LANE)
        pad = ((0, 0), (0, embed_pad - embed_size))
        self._center_lookup = jnp.pad(self.center_embeddings, pad)
        self._context_lookup = jnp.pad(self.context_embeddings, pad)

    def __call__(self, word_idxs: jax.Array, embedding_type: str) -> jax.Array:
        if embedding_type == "center":
            table = self._center_lookup
        elif embedding_type == "context":
            table = self._context_lookup
        else:
            raise ValueError(f"unknown embedding_type: {embedding_type}")
        return embedding_lookup(table, word_idxs, embed_size=self.embed_size)


if __name__ == "__main__":
    vocab_size = 64
    embed_size = 128

    key = jax.random.PRNGKey(0)
    k_model, k_idx1, k_idx2, k_idx3 = jax.random.split(key, 4)

    model = EmbeddingModel(vocab_size, embed_size, k_model)

    # Small 1-D batch, a 2-D (center, context) index array, and a longer batch
    # that exercises chunking + index padding.
    word_idxs_1d = jax.random.randint(k_idx1, (8,), 0, vocab_size, jnp.int32)
    word_idxs_2d = jax.random.randint(k_idx2, (3, 5), 0, vocab_size, jnp.int32)
    word_idxs_long = jax.random.randint(k_idx3, (600,), 0, vocab_size, jnp.int32)

    # Small table -> VMEM-resident fast path.
    center = jax.block_until_ready(model(word_idxs_1d, "center"))
    context = jax.block_until_ready(model(word_idxs_2d, "context"))
    center_long = jax.block_until_ready(model(word_idxs_long, "center"))

    # Force the HBM manual-gather path (vmem_table_bytes=0) so both kernel
    # variants are exercised and checked.
    center_hbm = jax.block_until_ready(
        embedding_lookup(model._center_lookup, word_idxs_long,
                         embed_size=embed_size, vmem_table_bytes=0))

    # Sanity checks against plain-JAX gathers.
    assert center.shape == (8, embed_size)
    assert context.shape == (3, 5, embed_size)
    assert center_long.shape == (600, embed_size)
    assert center_hbm.shape == (600, embed_size)
    assert jnp.allclose(center, model.center_embeddings[word_idxs_1d])
    assert jnp.allclose(context, model.context_embeddings[word_idxs_2d])
    assert jnp.allclose(center_long, model.center_embeddings[word_idxs_long])
    assert jnp.allclose(center_hbm, model.center_embeddings[word_idxs_long])

    print("KERNEL_OK")
</pallas_src>

<mosaic_0001>
module attributes {stable_mosaic.version = 11 : i64} {
  func.func @_gather_vmem_kernel(%arg0: i32, %arg1: memref<8xi32, #tpu.memory_space<smem>>, %arg2: memref<64x128xf32, #tpu.memory_space<vmem>>, %arg3: memref<8x128xf32, #tpu.memory_space<vmem>>) attributes {dimension_semantics = [#tpu.dimension_semantics<parallel>], iteration_bounds = array<i64: 1>, scalar_prefetch = 1 : i64, scratch_operands = 0 : i64, tpu.core_type = #tpu.core_type<tc>, window_params = [{pipeline_mode = #tpu.pipeline_mode<synchronous>, transform_indices = @transform_0, window_bounds = array<i64: 64, 128>}, {transform_indices = @transform_1, window_bounds = array<i64: 8, 128>}]} {
    %c8_i32 = arith.constant 8 : i32
    %0 = arith.muli %arg0, %c8_i32 : i32
    %c0_i32 = arith.constant 0 : i32
    %1 = arith.addi %0, %c0_i32 : i32
    %2 = arith.index_cast %1 : i32 to index
    %3 = memref.load %arg1[%2] : memref<8xi32, #tpu.memory_space<smem>>
    %4 = arith.index_cast %3 : i32 to index
    %c0 = arith.constant 0 : index
    %5 = vector.load %arg2[%4, %c0] : memref<64x128xf32, #tpu.memory_space<vmem>>, vector<1x128xf32>
    %6 = arith.index_cast %c0_i32 : i32 to index
    %c0_0 = arith.constant 0 : index
    %7 = vector.load %arg3[%6, %c0_0] : memref<8x128xf32, #tpu.memory_space<vmem>>, vector<1x128xf32>
    tpu.vector_store %arg3[%6, %c0_0], %5 {strides = array<i32>} : memref<8x128xf32, #tpu.memory_space<vmem>>, vector<1x128xf32>,
    %c1_i32 = arith.constant 1 : i32
    %8 = arith.addi %0, %c1_i32 : i32
    %9 = arith.index_cast %8 : i32 to index
    %10 = memref.load %arg1[%9] : memref<8xi32, #tpu.memory_space<smem>>
    %11 = arith.index_cast %10 : i32 to index
    %c0_1 = arith.constant 0 : index
    %12 = vector.load %arg2[%11, %c0_1] : memref<64x128xf32, #tpu.memory_space<vmem>>, vector<1x128xf32>
    %13 = arith.index_cast %c1_i32 : i32 to index
    %c0_2 = arith.constant 0 : index
    %14 = vector.load %arg3[%13, %c0_2] : memref<8x128xf32, #tpu.memory_space<vmem>>, vector<1x128xf32>
    tpu.vector_store %arg3[%13, %c0_2], %12 {strides = array<i32>} : memref<8x128xf32, #tpu.memory_space<vmem>>, vector<1x128xf32>,
    %c2_i32 = arith.constant 2 : i32
    %15 = arith.addi %0, %c2_i32 : i32
    %16 = arith.index_cast %15 : i32 to index
    %17 = memref.load %arg1[%16] : memref<8xi32, #tpu.memory_space<smem>>
    %18 = arith.index_cast %17 : i32 to index
    %c0_3 = arith.constant 0 : index
    %19 = vector.load %arg2[%18, %c0_3] : memref<64x128xf32, #tpu.memory_space<vmem>>, vector<1x128xf32>
    %20 = arith.index_cast %c2_i32 : i32 to index
    %c0_4 = arith.constant 0 : index
    %21 = vector.load %arg3[%20, %c0_4] : memref<8x128xf32, #tpu.memory_space<vmem>>, vector<1x128xf32>
    tpu.vector_store %arg3[%20, %c0_4], %19 {strides = array<i32>} : memref<8x128xf32, #tpu.memory_space<vmem>>, vector<1x128xf32>,
    %c3_i32 = arith.constant 3 : i32
    %22 = arith.addi %0, %c3_i32 : i32
    %23 = arith.index_cast %22 : i32 to index
    %24 = memref.load %arg1[%23] : memref<8xi32, #tpu.memory_space<smem>>
    %25 = arith.index_cast %24 : i32 to index
    %c0_5 = arith.constant 0 : index
    %26 = vector.load %arg2[%25, %c0_5] : memref<64x128xf32, #tpu.memory_space<vmem>>, vector<1x128xf32>
    %27 = arith.index_cast %c3_i32 : i32 to index
    %c0_6 = arith.constant 0 : index
    %28 = vector.load %arg3[%27, %c0_6] : memref<8x128xf32, #tpu.memory_space<vmem>>, vector<1x128xf32>
    tpu.vector_store %arg3[%27, %c0_6], %26 {strides = array<i32>} : memref<8x128xf32, #tpu.memory_space<vmem>>, vector<1x128xf32>,
    %c4_i32 = arith.constant 4 : i32
    %29 = arith.addi %0, %c4_i32 : i32
    %30 = arith.index_cast %29 : i32 to index
    %31 = memref.load %arg1[%30] : memref<8xi32, #tpu.memory_space<smem>>
    %32 = arith.index_cast %31 : i32 to index
    %c0_7 = arith.constant 0 : index
    %33 = vector.load %arg2[%32, %c0_7] : memref<64x128xf32, #tpu.memory_space<vmem>>, vector<1x128xf32>
    %34 = arith.index_cast %c4_i32 : i32 to index
    %c0_8 = arith.constant 0 : index
    %35 = vector.load %arg3[%34, %c0_8] : memref<8x128xf32, #tpu.memory_space<vmem>>, vector<1x128xf32>
    tpu.vector_store %arg3[%34, %c0_8], %33 {strides = array<i32>} : memref<8x128xf32, #tpu.memory_space<vmem>>, vector<1x128xf32>,
    %c5_i32 = arith.constant 5 : i32
    %36 = arith.addi %0, %c5_i32 : i32
    %37 = arith.index_cast %36 : i32 to index
    %38 = memref.load %arg1[%37] : memref<8xi32, #tpu.memory_space<smem>>
    %39 = arith.index_cast %38 : i32 to index
    %c0_9 = arith.constant 0 : index
    %40 = vector.load %arg2[%39, %c0_9] : memref<64x128xf32, #tpu.memory_space<vmem>>, vector<1x128xf32>
    %41 = arith.index_cast %c5_i32 : i32 to index
    %c0_10 = arith.constant 0 : index
    %42 = vector.load %arg3[%41, %c0_10] : memref<8x128xf32, #tpu.memory_space<vmem>>, vector<1x128xf32>
    tpu.vector_store %arg3[%41, %c0_10], %40 {strides = array<i32>} : memref<8x128xf32, #tpu.memory_space<vmem>>, vector<1x128xf32>,
    %c6_i32 = arith.constant 6 : i32
    %43 = arith.addi %0, %c6_i32 : i32
    %44 = arith.index_cast %43 : i32 to index
    %45 = memref.load %arg1[%44] : memref<8xi32, #tpu.memory_space<smem>>
    %46 = arith.index_cast %45 : i32 to index
    %c0_11 = arith.constant 0 : index
    %47 = vector.load %arg2[%46, %c0_11] : memref<64x128xf32, #tpu.memory_space<vmem>>, vector<1x128xf32>
    %48 = arith.index_cast %c6_i32 : i32 to index
    %c0_12 = arith.constant 0 : index
    %49 = vector.load %arg3[%48, %c0_12] : memref<8x128xf32, #tpu.memory_space<vmem>>, vector<1x128xf32>
    tpu.vector_store %arg3[%48, %c0_12], %47 {strides = array<i32>} : memref<8x128xf32, #tpu.memory_space<vmem>>, vector<1x128xf32>,
    %c7_i32 = arith.constant 7 : i32
    %50 = arith.addi %0, %c7_i32 : i32
    %51 = arith.index_cast %50 : i32 to index
    %52 = memref.load %arg1[%51] : memref<8xi32, #tpu.memory_space<smem>>
    %53 = arith.index_cast %52 : i32 to index
    %c0_13 = arith.constant 0 : index
    %54 = vector.load %arg2[%53, %c0_13] : memref<64x128xf32, #tpu.memory_space<vmem>>, vector<1x128xf32>
    %55 = arith.index_cast %c7_i32 : i32 to index
    %c0_14 = arith.constant 0 : index
    %56 = vector.load %arg3[%55, %c0_14] : memref<8x128xf32, #tpu.memory_space<vmem>>, vector<1x128xf32>
    tpu.vector_store %arg3[%55, %c0_14], %54 {strides = array<i32>} : memref<8x128xf32, #tpu.memory_space<vmem>>, vector<1x128xf32>,
    %c8_i32_15 = arith.constant 8 : i32
    return
  }
  func.func @transform_0(%arg0: i32, %arg1: memref<8xi32, #tpu.memory_space<smem>>) -> (i32, i32) {
    %c0_i32 = arith.constant 0 : i32
    %c0_i32_0 = arith.constant 0 : i32
    %c0_i32_1 = arith.constant 0 : i32
    return %c0_i32, %c0_i32_0 : i32, i32
  }
  func.func @transform_1(%arg0: i32, %arg1: memref<8xi32, #tpu.memory_space<smem>>) -> (i32, i32) {
    %c0_i32 = arith.constant 0 : i32
    %c0_i32_0 = arith.constant 0 : i32
    return %arg0, %c0_i32 : i32, i32
  }
}

</mosaic_0001>

<llo_original>
// kernel: tpu_custom_call.1
$region0: #{tpu_custom_call.1}
  #allocation0 [shape = 'u32[]', space=smem, size = 0x4, offset = 0x4, fixed_abs, tag = 'smem constant byte address 0x4 - core index']
  #allocation1 [shape = 'u32[72,128]{1,0:T(1,128)}', space=vmem, size = 0x9000, scoped, tag = 'internal scratch']
  #allocation2 [shape = 's32[1]{0}', space=sflag, size = 0x4, scoped, tag = 'scoped memory for tpu_custom_call.1']
  #allocation3 [shape = 'u8[512]{0}', space=smem, size = 0x200, scoped, tag = 'prefetched SMEM operand 0']
  %s0 = inlined_call_operand.hbm [shape: s32[8], index: 0, kind: input, shape index: {}]
  %s1 = inlined_call_operand.hbm [shape: f32[64,128], index: 1, kind: input, shape index: {}]
  %s2 = inlined_call_operand.hbm [shape: f32[8,128], index: 2, kind: output, shape index: {}]
  %s3 = sld [smem:[#allocation0]]
  $region18: #{tpu_custom_call.1} parent=0
    _
  %s5 = ssub.s32 1, %s3
  %s6 = scalar_select 0, %s5, %s3
  %s8 = sshll.u32 %s0, 4
  %s9 = int_to_ptr.hbm [resolvable:$true] %s8
  %11 = dma.hbm_to_smem %s9, 16, [#allocation3], [#allocation2]
  %13 = dma.done [#allocation2], 16
  %14 = sfence
  $region1: #{tpu_custom_call.1} parent=0
    #allocation4 [shape = 'u8[32768]{0}', space=vmem, size = 0x8000, scoped, tag = 'input window, operand 1, single buffered']
    #allocation5 [shape = 's32[1]{0}', space=sflag, size = 0x4, scoped, tag = 'scoped memory for tpu_custom_call.1']
    #allocation6 [shape = 's32[1]{0}', space=sflag, size = 0x4, scoped, tag = 'scoped memory for tpu_custom_call.1']
    #allocation7 [shape = 'u8[4096]{0}', space=vmem, size = 0x1000, scoped, tag = 'output window, operand 0, single buffered']
    %15 = vsyncpa [#allocation5], 0
    %16 = vsyncpa [#allocation6], 0
    // Predicated region
    $region2: #{tpu_custom_call.1} parent=1 // pred_check
      _
    $region3: #{tpu_custom_call.1} parent=1 // pred_check_branch
      %18 = sbr.rel (0) target = $region5
    $region4: #{tpu_custom_call.1} parent=1 // pred_region
      %20 = vsyncadd [#allocation5], 0
      %s21 = sshll.u32 %s1, 4
      %s22 = int_to_ptr.hbm [resolvable:$true] %s21
      %s23 = sshll.u32 [#allocation4], 4
      %s24 = int_to_ptr.vmem [resolvable:$true] %s23
      %29 = dma.hbm_to_vmem [thread:$0]  %s22, 1024, %s24, [#allocation5], 128, 128, 8
    $region5: #{tpu_custom_call.1} parent=1 // pred_fallthru
      _
    // Predicated region
    $region6: #{tpu_custom_call.1} parent=1 // pred_check
      _
    $region7: #{tpu_custom_call.1} parent=1 // pred_check_branch
      %31 = sbr.rel (0) target = $region9
    $region8: #{tpu_custom_call.1} parent=1 // pred_region
      %33 = dma.done [#allocation5], 1024
    $region9: #{tpu_custom_call.1} parent=1 // pred_fallthru
      _
    %s34 = smul.u32 0, 8
    %s35 = sld [smem:[#allocation3 + %s34]]
    %s36 = scalar_lea.vmem [#allocation4], %s35
    %v37 = vld [vmem:[%s36] sm:$0x1]
    %38 = vst [vmem:[#allocation7] sm:$0x1] %v37
    %s39 = sadd.s32 %s34, 1
    %s40 = sld [smem:[#allocation3 + %s39]]
    %s41 = scalar_lea.vmem [#allocation4], %s40
    %v42 = vld [vmem:[%s41] sm:$0x1]
    %43 = vst [vmem:[#allocation7 + $0x1] sm:$0x1] %v42
    %s44 = sadd.s32 %s34, 2
    %s45 = sld [smem:[#allocation3 + %s44]]
    %s46 = scalar_lea.vmem [#allocation4], %s45
    %v47 = vld [vmem:[%s46] sm:$0x1]
    %48 = vst [vmem:[#allocation7 + $0x2] sm:$0x1] %v47
    %s49 = sadd.s32 %s34, 3
    %s50 = sld [smem:[#allocation3 + %s49]]
    %s51 = scalar_lea.vmem [#allocation4], %s50
    %v52 = vld [vmem:[%s51] sm:$0x1]
    %53 = vst [vmem:[#allocation7 + $0x3] sm:$0x1] %v52
    %s54 = sadd.s32 %s34, 4
    %s55 = sld [smem:[#allocation3 + %s54]]
    %s56 = scalar_lea.vmem [#allocation4], %s55
    %v57 = vld [vmem:[%s56] sm:$0x1]
    %58 = vst [vmem:[#allocation7 + $0x4] sm:$0x1] %v57
    %s59 = sadd.s32 %s34, 5
    %s60 = sld [smem:[#allocation3 + %s59]]
    %s61 = scalar_lea.vmem [#allocation4], %s60
    %v62 = vld [vmem:[%s61] sm:$0x1]
    %63 = vst [vmem:[#allocation7 + $0x5] sm:$0x1] %v62
    %s64 = sadd.s32 %s34, 6
    %s65 = sld [smem:[#allocation3 + %s64]]
    %s66 = scalar_lea.vmem [#allocation4], %s65
    %v67 = vld [vmem:[%s66] sm:$0x1]
    %68 = vst [vmem:[#allocation7 + $0x6] sm:$0x1] %v67
    %s69 = sadd.s32 %s34, 7
    %s70 = sld [smem:[#allocation3 + %s69]]
    %s71 = scalar_lea.vmem [#allocation4], %s70
    %v72 = vld [vmem:[%s71] sm:$0x1]
    %73 = vst [vmem:[#allocation7 + $0x7] sm:$0x1] %v72
    // Predicated region
    $region10: #{tpu_custom_call.1} parent=1 // pred_check
      _
    $region11: #{tpu_custom_call.1} parent=1 // pred_check_branch
      %75 = sbr.rel (0) target = $region13
    $region12: #{tpu_custom_call.1} parent=1 // pred_region
      %77 = vsyncadd [#allocation6], 0
      %s79 = sshll.u32 [#allocation7], 4
      %s80 = int_to_ptr.vmem [resolvable:$true] %s79
      %s81 = sshll.u32 %s2, 4
      %s82 = int_to_ptr.hbm [resolvable:$true] %s81
      %84 = dma.vmem_to_hbm [thread:$0]  %s80, 128, %s82, [#allocation6]
    $region13: #{tpu_custom_call.1} parent=1 // pred_fallthru
      _
    // Predicated region
    $region14: #{tpu_custom_call.1} parent=1 // pred_check
      _
    $region15: #{tpu_custom_call.1} parent=1 // pred_check_branch
      %86 = sbr.rel (0) target = $region17
    $region16: #{tpu_custom_call.1} parent=1 // pred_region
      %88 = dma.done [#allocation6], 128
    $region17: #{tpu_custom_call.1} parent=1 // pred_fallthru
      _
    %89 = vsyncpa [#allocation5], 1
    %90 = vsyncpa [#allocation6], 1

</llo_original>
